<compile_context>
chip_gen: v7x
topology: tpu7x:2x2x1
jax: 0.10.0
libtpu: 0.0.40
codegen_flags: <defaults>
</compile_context>

<pallas_src>
import jax
import jax.numpy as jnp
from jax.experimental import pallas as pl
from jax.experimental.pallas import tpu as pltpu

LANE = 128      # vreg lane width
SUBLANE = 8     # f32 sublane granularity


def _round_up(v: int, m: int) -> int:
    return ((v + m - 1) // m) * m


def _logistic_kernel(wb_ref, x0_ref, x1_ref, o_ref):
    # wb_ref: SMEM (3,)  = [w0, w1, b]   (f32 scalars)
    # x0_ref/x1_ref: VMEM (TILE_R, 128)  feature-column slabs (f32)
    # o_ref:         VMEM (TILE_R, 128)  sigmoid output slab
    w0 = wb_ref[0]
    w1 = wb_ref[1]
    b = wb_ref[2]
    # Pure elementwise scalar-broadcast FMA on the VPU; sigmoid's exp sits in
    # the EUP slot (free in this mem-bound kernel).
    logits = x0_ref[...] * w0 + x1_ref[...] * w1 + b
    o_ref[...] = jax.nn.sigmoid(logits).astype(o_ref.dtype)


def logistic_forward(x, weight, bias, *, tile_rows=1024):
    """sigmoid(x @ weight.T + bias) for weight of shape (1, 2), bias (1,)."""
    n, f = x.shape
    assert f == 2, "LogisticClass uses nn.Linear(2, 1)"
    assert weight.shape == (1, f)
    out_dtype = x.dtype

    # ---- wrapper-side lane-dense layout plumbing -------------------------
    total_rows = pl.cdiv(n, LANE)                      # 128-lane rows needed
    tile_r = min(_round_up(tile_rows, SUBLANE),
                 _round_up(total_rows, SUBLANE))       # multiple of 8
    padded_rows = _round_up(total_rows, tile_r)
    padded_n = padded_rows * LANE
    num_tiles = padded_rows // tile_r

    xf = x.astype(jnp.float32)
    pad = padded_n - n
    x0 = jnp.pad(xf[:, 0], (0, pad)).reshape(padded_rows, LANE)
    x1 = jnp.pad(xf[:, 1], (0, pad)).reshape(padded_rows, LANE)

    # [w0, w1, b] as f32 scalars for SMEM.
    wb = jnp.concatenate(
        [weight.reshape(-1), bias.reshape(-1)]).astype(jnp.float32)   # (3,)

    # Per grid step: 2 input buffers + 1 output buffer, double-buffered.
    # tile_r=1024 -> 512 KiB/buffer -> ~3 MiB resident: safe on v5e/v6e/v7x.
    out = pl.pallas_call(
        _logistic_kernel,
        out_shape=jax.ShapeDtypeStruct((padded_rows, LANE), out_dtype),
        grid=(num_tiles,),
        in_specs=[
            pl.BlockSpec(memory_space=pltpu.MemorySpace.SMEM),       # wb
            pl.BlockSpec((tile_r, LANE), lambda i: (i, 0)),          # x0
            pl.BlockSpec((tile_r, LANE), lambda i: (i, 0)),          # x1
        ],
        out_specs=pl.BlockSpec((tile_r, LANE), lambda i: (i, 0)),
        compiler_params=pltpu.CompilerParams(
            dimension_semantics=("parallel",),
        ),
    )(wb, x0, x1)

    # Drop padding, restore (N, 1) to match PyTorch's output shape.
    return out.reshape(-1)[:n].reshape(n, 1)


if __name__ == "__main__":
    key = jax.random.PRNGKey(0)
    kx, kw, kb, kx2 = jax.random.split(key, 4)

    # Deterministic params mimicking nn.Linear(2,1)'s uniform(-1/sqrt(2), 1/sqrt(2)).
    bound = 1.0 / jnp.sqrt(2.0)
    weight = jax.random.uniform(kw, (1, 2), minval=-bound, maxval=bound,
                                dtype=jnp.float32)
    bias = jax.random.uniform(kb, (1,), minval=-bound, maxval=bound,
                              dtype=jnp.float32)

    # Small batch matching the module spec (Linear(2, 1)).
    x = jax.random.normal(kx, (8, 2), dtype=jnp.float32)
    out = jax.block_until_ready(logistic_forward(x, weight, bias))
    ref = jax.nn.sigmoid(x @ weight.T + bias)
    assert out.shape == (8, 1)
    assert jnp.allclose(out, ref, atol=1e-6), "mismatch vs reference (n=8)"

    # Second small batch that is NOT a multiple of the 128-lane slab width,
    # to exercise the padding / tail-handling path.
    x2 = jax.random.normal(kx2, (300, 2), dtype=jnp.float32)
    out2 = jax.block_until_ready(logistic_forward(x2, weight, bias))
    ref2 = jax.nn.sigmoid(x2 @ weight.T + bias)
    assert out2.shape == (300, 1)
    assert jnp.allclose(out2, ref2, atol=1e-6), "mismatch vs reference (n=300)"

    print("KERNEL_OK")
</pallas_src>

<mosaic_0001>
module attributes {stable_mosaic.version = 11 : i64} {
  func.func @_logistic_kernel(%arg0: i32, %arg1: memref<3xf32, #tpu.memory_space<smem>>, %arg2: memref<8x128xf32, #tpu.memory_space<vmem>>, %arg3: memref<8x128xf32, #tpu.memory_space<vmem>>, %arg4: memref<8x128xf32, #tpu.memory_space<vmem>>) attributes {dimension_semantics = [#tpu.dimension_semantics<parallel>], iteration_bounds = array<i64: 1>, scalar_prefetch = 0 : i64, scratch_operands = 0 : i64, tpu.core_type = #tpu.core_type<tc>, window_params = [{transform_indices = @transform_0, window_bounds = array<i64: 3>}, {transform_indices = @transform_1, window_bounds = array<i64: 8, 128>}, {transform_indices = @transform_2, window_bounds = array<i64: 8, 128>}, {transform_indices = @transform_3, window_bounds = array<i64: 8, 128>}]} {
    %c0 = arith.constant 0 : index
    %0 = memref.load %arg1[%c0] : memref<3xf32, #tpu.memory_space<smem>>
    %c1 = arith.constant 1 : index
    %1 = memref.load %arg1[%c1] : memref<3xf32, #tpu.memory_space<smem>>
    %c2 = arith.constant 2 : index
    %2 = memref.load %arg1[%c2] : memref<3xf32, #tpu.memory_space<smem>>
    %c0_0 = arith.constant 0 : index
    %c0_1 = arith.constant 0 : index
    %3 = vector.load %arg2[%c0_0, %c0_1] : memref<8x128xf32, #tpu.memory_space<vmem>>, vector<8x128xf32>
    %4 = vector.broadcast %0 : f32 to vector<8x128xf32>
    %5 = arith.mulf %3, %4 : vector<8x128xf32>
    %c0_2 = arith.constant 0 : index
    %c0_3 = arith.constant 0 : index
    %6 = vector.load %arg3[%c0_2, %c0_3] : memref<8x128xf32, #tpu.memory_space<vmem>>, vector<8x128xf32>
    %7 = vector.broadcast %1 : f32 to vector<8x128xf32>
    %8 = arith.mulf %6, %7 : vector<8x128xf32>
    %9 = arith.addf %5, %8 : vector<8x128xf32>
    %10 = vector.broadcast %2 : f32 to vector<8x128xf32>
    %11 = arith.addf %9, %10 : vector<8x128xf32>
    %12 = arith.negf %11 : vector<8x128xf32>
    %13 = math.exp %12 : vector<8x128xf32>
    %cst = arith.constant 1.000000e+00 : f32
    %14 = vector.broadcast %cst : f32 to vector<8x128xf32>
    %15 = arith.addf %14, %13 : vector<8x128xf32>
    %16 = arith.divf %14, %15 : vector<8x128xf32>
    %c0_4 = arith.constant 0 : index
    %c0_5 = arith.constant 0 : index
    %17 = vector.load %arg4[%c0_4, %c0_5] : memref<8x128xf32, #tpu.memory_space<vmem>>, vector<8x128xf32>
    tpu.vector_store %arg4[%c0_4, %c0_5], %16 {strides = array<i32>} : memref<8x128xf32, #tpu.memory_space<vmem>>, vector<8x128xf32>,
    return
  }
  func.func @transform_0(%arg0: i32) -> i32 {
    %c0_i32 = arith.constant 0 : i32
    %c0_i32_0 = arith.constant 0 : i32
    return %c0_i32 : i32
  }
  func.func @transform_1(%arg0: i32) -> (i32, i32) {
    %c0_i32 = arith.constant 0 : i32
    %c0_i32_0 = arith.constant 0 : i32
    return %arg0, %c0_i32 : i32, i32
  }
  func.func @transform_2(%arg0: i32) -> (i32, i32) {
    %c0_i32 = arith.constant 0 : i32
    %c0_i32_0 = arith.constant 0 : i32
    return %arg0, %c0_i32 : i32, i32
  }
  func.func @transform_3(%arg0: i32) -> (i32, i32) {
    %c0_i32 = arith.constant 0 : i32
    %c0_i32_0 = arith.constant 0 : i32
    return %arg0, %c0_i32 : i32, i32
  }
}

</mosaic_0001>

<llo_original>
// kernel: tpu_custom_call.1
$region0: #{tpu_custom_call.1}
  #allocation0 [shape = 'u32[]', space=smem, size = 0x4, offset = 0x4, fixed_abs, tag = 'smem constant byte address 0x4 - core index']
  #allocation1 [shape = 'u32[144,128]{1,0:T(1,128)}', space=vmem, size = 0x12000, scoped, tag = 'internal scratch']
  %s0 = inlined_call_operand.hbm [shape: f32[3], index: 0, kind: input, shape index: {}]
  %s1 = inlined_call_operand.hbm [shape: f32[8,128], index: 1, kind: input, shape index: {}]
  %s2 = inlined_call_operand.hbm [shape: f32[8,128], index: 2, kind: input, shape index: {}]
  %s3 = inlined_call_operand.hbm [shape: f32[8,128], index: 3, kind: output, shape index: {}]
  %s4 = sld [smem:[#allocation0]]
  $region34: #{tpu_custom_call.1} parent=0
    _
  %s6 = ssub.s32 1, %s4
  %s7 = scalar_select 0, %s6, %s4
  $region1: #{tpu_custom_call.1} parent=0
    #allocation2 [shape = 'u8[512]{0}', space=smem, size = 0x200, scoped, tag = 'input window, operand 0, single buffered']
    #allocation3 [shape = 's32[1]{0}', space=sflag, size = 0x4, scoped, tag = 'scoped memory for tpu_custom_call.1']
    #allocation4 [shape = 's32[1]{0}', space=sflag, size = 0x4, scoped, tag = 'scoped memory for tpu_custom_call.1']
    #allocation5 [shape = 's32[1]{0}', space=sflag, size = 0x4, scoped, tag = 'scoped memory for tpu_custom_call.1']
    #allocation6 [shape = 'u8[4096]{0}', space=vmem, size = 0x1000, scoped, tag = 'input window, operand 1, single buffered']
    #allocation7 [shape = 'u8[4096]{0}', space=vmem, size = 0x1000, scoped, tag = 'input window, operand 2, single buffered']
    #allocation8 [shape = 's32[1]{0}', space=sflag, size = 0x4, scoped, tag = 'scoped memory for tpu_custom_call.1']
    #allocation9 [shape = 'u8[4096]{0}', space=vmem, size = 0x1000, scoped, tag = 'output window, operand 0, single buffered']
    %8 = vsyncpa [#allocation5], 0
    %9 = vsyncpa [#allocation3], 0
    %10 = vsyncpa [#allocation8], 0
    %11 = vsyncpa [#allocation4], 0
    // Predicated region
    $region2: #{tpu_custom_call.1} parent=1 // pred_check
      _
    $region3: #{tpu_custom_call.1} parent=1 // pred_check_branch
      %13 = sbr.rel (0) target = $region5
    $region4: #{tpu_custom_call.1} parent=1 // pred_region
      %s15 = ssub.s32 16, 16
      %16 = vsyncadd [#allocation5], %s15
      %19 = dma.hbm_to_smem %s0, 16, [#allocation2], [#allocation5]
    $region5: #{tpu_custom_call.1} parent=1 // pred_fallthru
      _
    // Predicated region
    $region6: #{tpu_custom_call.1} parent=1 // pred_check
      _
    $region7: #{tpu_custom_call.1} parent=1 // pred_check_branch
      %21 = sbr.rel (0) target = $region9
    $region8: #{tpu_custom_call.1} parent=1 // pred_region
      %s23 = ssub.s32 128, 128
      %24 = vsyncadd [#allocation3], %s23
      %s26 = sshll.u32 [#allocation6], 4
      %s27 = int_to_ptr.vmem [resolvable:$true] %s26
      %29 = dma.hbm_to_vmem [thread:$0]  %s1, 128, %s27, [#allocation3]
    $region9: #{tpu_custom_call.1} parent=1 // pred_fallthru
      _
    // Predicated region
    $region10: #{tpu_custom_call.1} parent=1 // pred_check
      _
    $region11: #{tpu_custom_call.1} parent=1 // pred_check_branch
      %31 = sbr.rel (0) target = $region13
    $region12: #{tpu_custom_call.1} parent=1 // pred_region
      %s33 = ssub.s32 128, 128
      %34 = vsyncadd [#allocation8], %s33
      %s36 = sshll.u32 [#allocation7], 4
      %s37 = int_to_ptr.vmem [resolvable:$true] %s36
      %39 = dma.hbm_to_vmem [thread:$0]  %s2, 128, %s37, [#allocation8]
    $region13: #{tpu_custom_call.1} parent=1 // pred_fallthru
      _
    // Predicated region
    $region14: #{tpu_custom_call.1} parent=1 // pred_check
      _
    $region15: #{tpu_custom_call.1} parent=1 // pred_check_branch
      %41 = sbr.rel (0) target = $region17
    $region16: #{tpu_custom_call.1} parent=1 // pred_region
      %42 = dma.done [#allocation5], 16
    $region17: #{tpu_custom_call.1} parent=1 // pred_fallthru
      _
    // Predicated region
    $region18: #{tpu_custom_call.1} parent=1 // pred_check
      _
    $region19: #{tpu_custom_call.1} parent=1 // pred_check_branch
      %44 = sbr.rel (0) target = $region21
    $region20: #{tpu_custom_call.1} parent=1 // pred_region
      %45 = dma.done [#allocation3], 128
    $region21: #{tpu_custom_call.1} parent=1 // pred_fallthru
      _
    // Predicated region
    $region22: #{tpu_custom_call.1} parent=1 // pred_check
      _
    $region23: #{tpu_custom_call.1} parent=1 // pred_check_branch
      %47 = sbr.rel (0) target = $region25
    $region24: #{tpu_custom_call.1} parent=1 // pred_region
      %48 = dma.done [#allocation8], 128
    $region25: #{tpu_custom_call.1} parent=1 // pred_fallthru
      _
    %49 = sfence
    %s50 = sld [smem:[#allocation2]]
    %s51 = sld [smem:[#allocation2 + $0x1]]
    %s52 = sld [smem:[#allocation2 + $0x2]]
    %v53 = vld [vmem:[#allocation6] sm:$0xff]
    %v54 = vstv %s50
    %v55 = vmul.f32 %v53, %v54
    %v56 = vld [vmem:[#allocation7] sm:$0xff]
    %v57 = vstv %s51
    %v58 = vmul.f32 %v56, %v57
    %v59 = vadd.f32 %v55, %v58
    %v60 = vstv %s52
    %v61 = vadd.f32 %v59, %v60
    %v62 = vxor.u32 %v61, 2147483648
    %v63 = vmul.f32 %v62, 1.442695
    %v64 = vpow.pop %v63
    %v65 = vadd.f32 %v64, 1.0
    %v66 = vrcp.pop %v65
    %v67 = vmul.f32 1.0, %v66
    %68 = vst [vmem:[#allocation9] sm:$0xff] %v67
    // Predicated region
    $region26: #{tpu_custom_call.1} parent=1 // pred_check
      _
    $region27: #{tpu_custom_call.1} parent=1 // pred_check_branch
      %70 = sbr.rel (0) target = $region29
    $region28: #{tpu_custom_call.1} parent=1 // pred_region
      %s72 = ssub.s32 128, 128
      %73 = vsyncadd [#allocation4], %s72
      %s75 = sshll.u32 [#allocation9], 4
      %s76 = int_to_ptr.vmem [resolvable:$true] %s75
      %78 = dma.vmem_to_hbm [thread:$0]  %s76, 128, %s3, [#allocation4]
    $region29: #{tpu_custom_call.1} parent=1 // pred_fallthru
      _
    // Predicated region
    $region30: #{tpu_custom_call.1} parent=1 // pred_check
      _
    $region31: #{tpu_custom_call.1} parent=1 // pred_check_branch
      %80 = sbr.rel (0) target = $region33
    $region32: #{tpu_custom_call.1} parent=1 // pred_region
      %81 = dma.done [#allocation4], 128
    $region33: #{tpu_custom_call.1} parent=1 // pred_fallthru
      _
    %82 = vsyncpa [#allocation3], 1
    %83 = vsyncpa [#allocation8], 1
    %84 = vsyncpa [#allocation4], 1
    %85 = vsyncpa [#allocation5], 1

</llo_original>
